<compile_context>
chip_gen: v7x
topology: tpu7x:2x2x1
jax: 0.10.0
libtpu: 0.0.40
codegen_flags: <defaults>
</compile_context>

<pallas_src>
import functools

import numpy as np
import jax
import jax.numpy as jnp
from jax import lax
from jax.experimental import pallas as pl
from jax.experimental.pallas import tpu as pltpu

NEG_SLOPE = 0.01          # torch.nn.LeakyReLU default

# Tile budgets.  Worst-case live VMEM (1024x1024 f32 output tile, double
# buffered, plus full-tile intermediates on diagonal tiles) stays under the
# explicit 48 MiB scoped limit below, which fits v7x's 64 MiB physical VMEM
# and leaves large headroom on v5e/v6e (128 MiB).
MLP_ROW_TILE = 1024       # feature-extractor rows per grid step
ARD_ROW_TILE = 1024       # K tile rows (sublane axis, multiple of 8)
ARD_COL_TILE = 1024       # K tile cols (lane axis, multiple of 128)
HEAD_COL_TILE = 256       # GP-head test-column tile (lane axis)
HEAD_N_TILE = 1024        # GP-head training-N chunk (reduction axis)
VMEM_LIMIT = 48 * 1024 * 1024


def _round_up(x, m):
    return ((x + m - 1) // m) * m


def _tile_and_pad(n, max_tile):
    """Return (padded_n, tile): single full block if it fits, else tile+pad."""
    if n <= max_tile:
        return n, n
    return _round_up(n, max_tile), max_tile


def _pad_rows(a, rows):
    return a if a.shape[0] == rows else jnp.pad(a, ((0, rows - a.shape[0]), (0, 0)))


def _pad_cols(a, cols):
    return a if a.shape[1] == cols else jnp.pad(a, ((0, 0), (0, cols - a.shape[1])))


def _sspec():
    # whole scalar array resident in SMEM
    return pl.BlockSpec(memory_space=pltpu.MemorySpace.SMEM)


def _leaky(x):
    return jnp.where(x > 0, x, NEG_SLOPE * x)


# ---------------------------------------------------------------------------
# Kernel 1: fused feature-extractor MLP + ARD lengthscale pre-scaling
#   Linear(d,2d) -> LeakyReLU -> Linear(2d,2d) -> LeakyReLU
#   -> Linear(2d,2d) -> LeakyReLU -> Linear(2d,dp) -> (* exp(-log_ls))
#   Second output: squared row norms of the scaled features (hoisted out of
#   the downstream distance kernels).
# ---------------------------------------------------------------------------
def mlp_kernel(x_ref, w1, b1, w2, b2, w3, b3, w4, b4, loglen_ref,
               f_ref, nrm_ref):
    h = jnp.dot(x_ref[...], w1[...], preferred_element_type=jnp.float32) + b1[...]
    h = _leaky(h)
    h = jnp.dot(h, w2[...], preferred_element_type=jnp.float32) + b2[...]
    h = _leaky(h)
    h = jnp.dot(h, w3[...], preferred_element_type=jnp.float32) + b3[...]
    h = _leaky(h)
    h = jnp.dot(h, w4[...], preferred_element_type=jnp.float32) + b4[...]
    # fused ARD pre-scaling:  f / exp(log_ls)  ==  f * exp(-log_ls)
    f = h * jnp.exp(-loglen_ref[...])
    f_ref[...] = f
    nrm_ref[...] = jnp.sum(f * f, axis=1, keepdims=True)


def mlp_features(x, mlp_params, log_length_scale):
    r, d_in = x.shape
    d_out = mlp_params[-2].shape[1]          # lane-padded feature width
    rp, tr = _tile_and_pad(r, MLP_ROW_TILE)
    xp = _pad_rows(x, rp)
    feats, norms = pl.pallas_call(
        mlp_kernel,
        out_shape=(jax.ShapeDtypeStruct((rp, d_out), jnp.float32),
                   jax.ShapeDtypeStruct((rp, 1), jnp.float32)),
        grid=(rp // tr,),
        in_specs=[pl.BlockSpec((tr, d_in), lambda r_: (r_, 0))]
                + [pl.BlockSpec(p.shape, lambda r_: (0, 0)) for p in mlp_params]
                + [pl.BlockSpec(log_length_scale.shape, lambda r_: (0, 0))],
        out_specs=(pl.BlockSpec((tr, d_out), lambda r_: (r_, 0)),
                   pl.BlockSpec((tr, 1), lambda r_: (r_, 0))),
        compiler_params=pltpu.CompilerParams(
            dimension_semantics=("parallel",),
            vmem_limit_bytes=VMEM_LIMIT),
    )(xp, *mlp_params, log_length_scale)
    if rp != r:
        feats, norms = feats[:r], norms[:r]
    return feats, norms


# ---------------------------------------------------------------------------
# Kernel 2: ARD-RBF kernel matrix on pre-scaled features, 2-D tiled
#   K(z1, z2) = exp(log_scale - 0.5 * ||z1 - z2||^2)   [+ noise on the diag]
#   Squared norms are precomputed inputs; the diag-noise iota/select only runs
#   on tiles whose row range intersects their column range (pl.when gate).
# ---------------------------------------------------------------------------
def ard_kernel_body(logscale_ref, noise_ref, x1_ref, x2_ref, n1_ref, n2_ref,
                    o_ref, *, add_diag_noise):
    d12 = lax.dot_general(x1_ref[...], x2_ref[...], (((1,), (1,)), ((), ())),
                          preferred_element_type=jnp.float32)        # (tm, tn)
    sq = jnp.maximum(n1_ref[...] - 2.0 * d12 + n2_ref[...], 0.0)
    # signal scale folded into the exponent: one EUP exp pass, no extra VPU mul
    o_ref[...] = jnp.exp(logscale_ref[0, 0] - 0.5 * sq)
    if add_diag_noise:
        tm, tn = o_ref.shape
        r0 = pl.program_id(0) * tm
        c0 = pl.program_id(1) * tn

        @pl.when(jnp.logical_and(r0 < c0 + tn, c0 < r0 + tm))
        def _():
            rows = r0 + lax.broadcasted_iota(jnp.int32, (tm, tn), 0)
            cols = c0 + lax.broadcasted_iota(jnp.int32, (tm, tn), 1)
            o_ref[...] = jnp.where(rows == cols,
                                   o_ref[...] + noise_ref[0, 0], o_ref[...])


def ard_matrix(x1, x2, sq1, sq2, log_scale, noise, *, add_diag_noise=False):
    n1, d = x1.shape
    n2 = x2.shape[0]
    n1p, tm = _tile_and_pad(n1, ARD_ROW_TILE)
    n2p, tn = _tile_and_pad(n2, ARD_COL_TILE)
    kernel = functools.partial(ard_kernel_body, add_diag_noise=add_diag_noise)
    out = pl.pallas_call(
        kernel,
        out_shape=jax.ShapeDtypeStruct((n1p, n2p), jnp.float32),
        grid=(n1p // tm, n2p // tn),
        in_specs=[_sspec(), _sspec(),
                  pl.BlockSpec((tm, d), lambda i, j: (i, 0)),
                  pl.BlockSpec((tn, d), lambda i, j: (j, 0)),
                  pl.BlockSpec((tm, 1), lambda i, j: (i, 0)),
                  pl.BlockSpec((1, tn), lambda i, j: (0, j))],
        out_specs=pl.BlockSpec((tm, tn), lambda i, j: (i, j)),
        compiler_params=pltpu.CompilerParams(
            dimension_semantics=("parallel", "parallel"),
            vmem_limit_bytes=VMEM_LIMIT),
    )(log_scale, noise,
      _pad_rows(x1, n1p), _pad_rows(x2, n2p),
      _pad_rows(sq1, n1p), _pad_rows(sq2, n2p).T)
    if (n1p, n2p) != (n1, n2):
        out = out[:n1, :n2]
    return out


# ---------------------------------------------------------------------------
# Kernel 3: GP prediction head, tiled over test columns (parallel) x N-chunks
#           (arbitrary, accumulated in the resident output block)
#   mu^T[:, j]  = sum_k alpha_k^T @ K_s_k[:, j]
#   cov[j]      = colsum_valid(K_ss)[:, j] - sum_k rowsum(v)_k . v_k[:, j] + noise
#   K_ss is recomputed tile-wise from the pre-scaled test features; its masked
#   column sum is a single MXU matvec with a precomputed validity row.
# ---------------------------------------------------------------------------
def gp_head_kernel(logscale_ref, noise_ref,
                   ft_ref, ftc_ref, nall_ref, ncol_ref, mask_ref,
                   ks_ref, v_ref, rsumv_ref, alpha_ref,
                   mu_t_ref, cov_ref):
    k_idx = pl.program_id(1)

    # per-(j, k) chunk contributions (transposed feed only on tiny operands)
    mu_chunk = lax.dot_general(alpha_ref[...], ks_ref[...],
                               (((0,), (0,)), ((), ())),
                               preferred_element_type=jnp.float32)    # (OUT, tn)
    cvtv_chunk = lax.dot_general(rsumv_ref[...], v_ref[...],
                                 (((0,), (0,)), ((), ())),
                                 preferred_element_type=jnp.float32)  # (1, tn)

    @pl.when(k_idx == 0)
    def _():
        # column sums of K_ss for this test-column tile (computed once per j,
        # K_ss never touches HBM); masking + axis-0 reduce fused into one MXU op.
        z_all = ft_ref[...]                                   # (Mp, dp)
        z_col = ftc_ref[...]                                  # (tn, dp)
        d12 = lax.dot_general(z_all, z_col, (((1,), (1,)), ((), ())),
                              preferred_element_type=jnp.float32)     # (Mp, tn)
        sq = jnp.maximum(nall_ref[...] - 2.0 * d12 + ncol_ref[...], 0.0)
        kss = jnp.exp(logscale_ref[0, 0] - 0.5 * sq)
        colsum = lax.dot_general(mask_ref[...], kss, (((1,), (0,)), ((), ())),
                                 preferred_element_type=jnp.float32)  # (1, tn)
        mu_t_ref[...] = mu_chunk
        cov_ref[...] = colsum - cvtv_chunk + noise_ref[0, 0]

    @pl.when(k_idx > 0)
    def _():
        mu_t_ref[...] += mu_chunk
        cov_ref[...] -= cvtv_chunk


def gp_head(k_s, v, alpha, f_test, nrm_test, log_scale, noise):
    n, m = k_s.shape
    d = f_test.shape[1]
    out_dim = alpha.shape[1]
    mp, tn = _tile_and_pad(m, HEAD_COL_TILE)
    n_p, tk = _tile_and_pad(n, HEAD_N_TILE)

    k_s_p = _pad_rows(_pad_cols(k_s, mp), n_p)
    v_p = _pad_rows(_pad_cols(v, mp), n_p)
    alpha_p = _pad_rows(alpha, n_p)
    rsum_v = _pad_rows(jnp.sum(v, axis=1, keepdims=True), n_p)   # (n_p, 1)
    ft_p = _pad_rows(f_test, mp)
    nall_p = _pad_rows(nrm_test, mp)                              # (mp, 1)
    ncol_row = nall_p.T                                           # (1, mp)
    mask_row = (jnp.arange(mp) < m).astype(jnp.float32).reshape(1, mp)

    mu_t, cov_row = pl.pallas_call(
        gp_head_kernel,
        out_shape=(jax.ShapeDtypeStruct((out_dim, mp), jnp.float32),
                   jax.ShapeDtypeStruct((1, mp), jnp.float32)),
        grid=(mp // tn, n_p // tk),
        in_specs=[_sspec(), _sspec(),
                  pl.BlockSpec((mp, d), lambda j, k: (0, 0)),
                  pl.BlockSpec((tn, d), lambda j, k: (j, 0)),
                  pl.BlockSpec((mp, 1), lambda j, k: (0, 0)),
                  pl.BlockSpec((1, tn), lambda j, k: (0, j)),
                  pl.BlockSpec((1, mp), lambda j, k: (0, 0)),
                  pl.BlockSpec((tk, tn), lambda j, k: (k, j)),
                  pl.BlockSpec((tk, tn), lambda j, k: (k, j)),
                  pl.BlockSpec((tk, 1), lambda j, k: (k, 0)),
                  pl.BlockSpec((tk, out_dim), lambda j, k: (k, 0))],
        out_specs=(pl.BlockSpec((out_dim, tn), lambda j, k: (0, j)),
                   pl.BlockSpec((1, tn), lambda j, k: (0, j))),
        compiler_params=pltpu.CompilerParams(
            dimension_semantics=("parallel", "arbitrary"),
            vmem_limit_bytes=VMEM_LIMIT),
    )(log_scale, noise, ft_p, ft_p, nall_p, ncol_row, mask_row,
      k_s_p, v_p, rsum_v, alpha_p)

    mu = mu_t[:, :m].T                     # (m, out_dim)
    cov = cov_row[0, :m].reshape(-1, 1)    # (m, 1)
    return mu, cov


# ---------------------------------------------------------------------------
# CIGP_DKL forward (glue in plain JAX; hot path in the Pallas kernels above)
# ---------------------------------------------------------------------------
def cigp_dkl_forward(params, x_test):
    X, Y = params["X"], params["Y"]          # already normalized
    w1, b1, w2, b2, w3, b3, w4, b4 = params["mlp"]
    log_ls = params["log_length_scale"]
    log_scale = params["log_scale"]
    noise = jnp.exp(-params["log_beta"]).reshape(1, 1)   # beta^{-1}

    N = X.shape[0]
    d = log_ls.shape[1]
    dp = _round_up(d, 128)
    if dp != d:
        # zero-pad the learned feature dim to a full lane width: padded lanes
        # get zero w4 columns + zero bias -> exactly 0 features, and padded
        # log_ls entries are 0 so exp(-0)=1 keeps them 0 after scaling.
        # Distances / norms are unchanged; stores & loads become unmasked.
        w4 = jnp.pad(w4, ((0, 0), (0, dp - d)))
        b4 = jnp.pad(b4, ((0, 0), (0, dp - d)))
        log_ls = jnp.pad(log_ls, ((0, 0), (0, dp - d)))
    mlp_params = (w1, b1, w2, b2, w3, b3, w4, b4)

    # one MLP pass over [X; x_test]; lengthscale scaling fused in the epilogue,
    # squared row norms emitted alongside.
    feats, norms = mlp_features(jnp.concatenate([X, x_test], axis=0),
                                mlp_params, log_ls)
    f_train, f_test = feats[:N], feats[N:]
    n_train, n_test = norms[:N], norms[N:]

    # noise diagonal folded inside the kernel (no K + noise*eye pass)
    K = ard_matrix(f_train, f_train, n_train, n_train, log_scale, noise,
                   add_diag_noise=True)
    K_s = ard_matrix(f_train, f_test, n_train, n_test, log_scale, noise,
                     add_diag_noise=False)

    # TODO(synk): Cholesky factorization / triangular solves have no Pallas
    # equivalent; done in plain JAX.
    L = jnp.linalg.cholesky(K)
    alpha = jax.scipy.linalg.cho_solve((L, True), Y)                 # K^{-1} Y
    v = jax.scipy.linalg.solve_triangular(L, K_s, lower=True)        # L^{-1} K_s

    mu, cov = gp_head(K_s, v, alpha, f_test, n_test, log_scale, noise)
    return mu, cov


# ---------------------------------------------------------------------------
# Pure-JAX reference for verification
# ---------------------------------------------------------------------------
def reference_forward(params, x_test):
    def mlp(x):
        w1, b1, w2, b2, w3, b3, w4, b4 = params["mlp"]
        h = x @ w1 + b1
        h = jnp.where(h > 0, h, NEG_SLOPE * h)
        h2 = h @ w2 + b2
        h2 = jnp.where(h2 > 0, h2, NEG_SLOPE * h2)
        h3 = h2 @ w3 + b3
        h3 = jnp.where(h3 > 0, h3, NEG_SLOPE * h3)
        return h3 @ w4 + b4

    def ard(a, b):
        ls = jnp.exp(params["log_length_scale"])
        a, b = a / ls, b / ls
        sq = (jnp.sum(a * a, 1)[:, None] + jnp.sum(b * b, 1)[None, :]
              - 2.0 * a @ b.T)
        return jnp.exp(params["log_scale"][0, 0]) * jnp.exp(-0.5 * sq)

    X, Y = params["X"], params["Y"]
    noise = jnp.exp(-params["log_beta"])[0]
    xt, xq = mlp(X), mlp(x_test)
    K = ard(xt, xt) + noise * jnp.eye(X.shape[0])
    K_s = ard(xt, xq)
    K_ss = ard(xq, xq)
    L = jnp.linalg.cholesky(K)
    alpha = jax.scipy.linalg.cho_solve((L, True), Y)
    v = jax.scipy.linalg.solve_triangular(L, K_s, lower=True)
    mu = K_s.T @ alpha
    cov = K_ss - v.T @ v
    cov = cov.sum(axis=0).reshape(-1, 1) + noise
    return mu, cov


# ---------------------------------------------------------------------------
if __name__ == "__main__":
    key = jax.random.PRNGKey(0)
    kx, ky, kq, *kw = jax.random.split(key, 12)

    N_train, N_test, D, OUT = 32, 16, 8, 2
    H = 2 * D

    X_raw = jax.random.normal(kx, (N_train, D), jnp.float32)
    Y_raw = jax.random.normal(ky, (N_train, OUT), jnp.float32)
    x_test = jax.random.normal(kq, (N_test, D), jnp.float32)

    # DataNormalization (glue): per-column for x, whole-tensor for y (mode 0)
    X = (X_raw - X_raw.mean(0)) / (X_raw.std(0) + 1e-8)
    Y = (Y_raw - Y_raw.mean()) / (Y_raw.std() + 1e-8)

    def lin(k, fan_in, fan_out):
        w = 0.3 * jax.random.normal(k, (fan_in, fan_out), jnp.float32)
        b = jnp.zeros((1, fan_out), jnp.float32)
        return w, b

    w1, b1 = lin(kw[0], D, H)
    w2, b2 = lin(kw[1], H, H)
    w3, b3 = lin(kw[2], H, H)
    w4, b4 = lin(kw[3], H, D)

    params = dict(
        X=X, Y=Y,
        mlp=(w1, b1, w2, b2, w3, b3, w4, b4),
        log_length_scale=jnp.zeros((1, D), jnp.float32),   # ARD lengthscales
        log_scale=jnp.zeros((1, 1), jnp.float32),          # ARD signal scale
        log_beta=jnp.zeros((1,), jnp.float32),             # noise precision
    )

    mu, cov = cigp_dkl_forward(params, x_test)
    mu, cov = jax.block_until_ready((mu, cov))

    mu_ref, cov_ref = reference_forward(params, x_test)
    np.testing.assert_allclose(np.asarray(mu), np.asarray(mu_ref),
                               rtol=1e-3, atol=1e-3)
    np.testing.assert_allclose(np.asarray(cov), np.asarray(cov_ref),
                               rtol=1e-3, atol=1e-3)

    assert mu.shape == (N_test, OUT) and cov.shape == (N_test, 1)
    print("KERNEL_OK")
</pallas_src>

<mosaic_0001>
module attributes {stable_mosaic.version = 11 : i64} {
  func.func @mlp_kernel(%arg0: i32, %arg1: memref<48x8xf32, #tpu.memory_space<vmem>>, %arg2: memref<8x16xf32, #tpu.memory_space<vmem>>, %arg3: memref<1x16xf32, #tpu.memory_space<vmem>>, %arg4: memref<16x16xf32, #tpu.memory_space<vmem>>, %arg5: memref<1x16xf32, #tpu.memory_space<vmem>>, %arg6: memref<16x16xf32, #tpu.memory_space<vmem>>, %arg7: memref<1x16xf32, #tpu.memory_space<vmem>>, %arg8: memref<16x128xf32, #tpu.memory_space<vmem>>, %arg9: memref<1x128xf32, #tpu.memory_space<vmem>>, %arg10: memref<1x128xf32, #tpu.memory_space<vmem>>, %arg11: memref<48x128xf32, #tpu.memory_space<vmem>>, %arg12: memref<48x1xf32, #tpu.memory_space<vmem>>) attributes {dimension_semantics = [#tpu.dimension_semantics<parallel>], iteration_bounds = array<i64: 1>, scalar_prefetch = 0 : i64, scratch_operands = 0 : i64, tpu.core_type = #tpu.core_type<tc>, window_params = [{transform_indices = @transform_0, window_bounds = array<i64: 48, 8>}, {pipeline_mode = #tpu.pipeline_mode<synchronous>, transform_indices = @transform_1, window_bounds = array<i64: 8, 16>}, {pipeline_mode = #tpu.pipeline_mode<synchronous>, transform_indices = @transform_2, window_bounds = array<i64: 1, 16>}, {pipeline_mode = #tpu.pipeline_mode<synchronous>, transform_indices = @transform_3, window_bounds = array<i64: 16, 16>}, {pipeline_mode = #tpu.pipeline_mode<synchronous>, transform_indices = @transform_4, window_bounds = array<i64: 1, 16>}, {pipeline_mode = #tpu.pipeline_mode<synchronous>, transform_indices = @transform_5, window_bounds = array<i64: 16, 16>}, {pipeline_mode = #tpu.pipeline_mode<synchronous>, transform_indices = @transform_6, window_bounds = array<i64: 1, 16>}, {pipeline_mode = #tpu.pipeline_mode<synchronous>, transform_indices = @transform_7, window_bounds = array<i64: 16, 128>}, {pipeline_mode = #tpu.pipeline_mode<synchronous>, transform_indices = @transform_8, window_bounds = array<i64: 1, 128>}, {pipeline_mode = #tpu.pipeline_mode<synchronous>, transform_indices = @transform_9, window_bounds = array<i64: 1, 128>}, {transform_indices = @transform_10, window_bounds = array<i64: 48, 128>}, {transform_indices = @transform_11, window_bounds = array<i64: 48, 1>}]} {
    %c0 = arith.constant 0 : index
    %c0_0 = arith.constant 0 : index
    %0 = vector.load %arg1[%c0, %c0_0] : memref<48x8xf32, #tpu.memory_space<vmem>>, vector<48x8xf32>
    %c0_1 = arith.constant 0 : index
    %c0_2 = arith.constant 0 : index
    %1 = vector.load %arg2[%c0_1, %c0_2] : memref<8x16xf32, #tpu.memory_space<vmem>>, vector<8x16xf32>
    %cst = arith.constant dense<0.000000e+00> : vector<48x16xf32>
    %2 = tpu.matmul %0, %1, %cst {dimension_numbers = #tpu.dot_dimension_numbers<[1], [0], [0], [1], [0, 0, 1, 1], [], []>} : vector<48x8xf32>, vector<8x16xf32>, vector<48x16xf32> -> vector<48x16xf32>
    %c0_3 = arith.constant 0 : index
    %c0_4 = arith.constant 0 : index
    %3 = vector.load %arg3[%c0_3, %c0_4] : memref<1x16xf32, #tpu.memory_space<vmem>>, vector<1x16xf32>
    %4 = vector.broadcast %3 : vector<1x16xf32> to vector<48x16xf32>
    %5 = arith.addf %2, %4 : vector<48x16xf32>
    %cst_5 = arith.constant 0.000000e+00 : f32
    %6 = vector.broadcast %cst_5 : f32 to vector<48x16xf32>
    %7 = arith.cmpf ogt, %5, %6 : vector<48x16xf32>
    %cst_6 = arith.constant 0.00999999977 : f32
    %8 = vector.broadcast %cst_6 : f32 to vector<48x16xf32>
    %9 = arith.mulf %8, %5 : vector<48x16xf32>
    %10 = arith.select %7, %5, %9 : vector<48x16xi1>, vector<48x16xf32>
    %c0_7 = arith.constant 0 : index
    %c0_8 = arith.constant 0 : index
    %11 = vector.load %arg4[%c0_7, %c0_8] : memref<16x16xf32, #tpu.memory_space<vmem>>, vector<16x16xf32>
    %cst_9 = arith.constant dense<0.000000e+00> : vector<48x16xf32>
    %12 = tpu.matmul %10, %11, %cst_9 {dimension_numbers = #tpu.dot_dimension_numbers<[1], [0], [0], [1], [0, 0, 1, 1], [], []>} : vector<48x16xf32>, vector<16x16xf32>, vector<48x16xf32> -> vector<48x16xf32>
    %c0_10 = arith.constant 0 : index
    %c0_11 = arith.constant 0 : index
    %13 = vector.load %arg5[%c0_10, %c0_11] : memref<1x16xf32, #tpu.memory_space<vmem>>, vector<1x16xf32>
    %14 = vector.broadcast %13 : vector<1x16xf32> to vector<48x16xf32>
    %15 = arith.addf %12, %14 : vector<48x16xf32>
    %cst_12 = arith.constant 0.000000e+00 : f32
    %16 = vector.broadcast %cst_12 : f32 to vector<48x16xf32>
    %17 = arith.cmpf ogt, %15, %16 : vector<48x16xf32>
    %cst_13 = arith.constant 0.00999999977 : f32
    %18 = vector.broadcast %cst_13 : f32 to vector<48x16xf32>
    %19 = arith.mulf %18, %15 : vector<48x16xf32>
    %20 = arith.select %17, %15, %19 : vector<48x16xi1>, vector<48x16xf32>
    %c0_14 = arith.constant 0 : index
    %c0_15 = arith.constant 0 : index
    %21 = vector.load %arg6[%c0_14, %c0_15] : memref<16x16xf32, #tpu.memory_space<vmem>>, vector<16x16xf32>
    %cst_16 = arith.constant dense<0.000000e+00> : vector<48x16xf32>
    %22 = tpu.matmul %20, %21, %cst_16 {dimension_numbers = #tpu.dot_dimension_numbers<[1], [0], [0], [1], [0, 0, 1, 1], [], []>} : vector<48x16xf32>, vector<16x16xf32>, vector<48x16xf32> -> vector<48x16xf32>
    %c0_17 = arith.constant 0 : index
    %c0_18 = arith.constant 0 : index
    %23 = vector.load %arg7[%c0_17, %c0_18] : memref<1x16xf32, #tpu.memory_space<vmem>>, vector<1x16xf32>
    %24 = vector.broadcast %23 : vector<1x16xf32> to vector<48x16xf32>
    %25 = arith.addf %22, %24 : vector<48x16xf32>
    %cst_19 = arith.constant 0.000000e+00 : f32
    %26 = vector.broadcast %cst_19 : f32 to vector<48x16xf32>
    %27 = arith.cmpf ogt, %25, %26 : vector<48x16xf32>
    %cst_20 = arith.constant 0.00999999977 : f32
    %28 = vector.broadcast %cst_20 : f32 to vector<48x16xf32>
    %29 = arith.mulf %28, %25 : vector<48x16xf32>
    %30 = arith.select %27, %25, %29 : vector<48x16xi1>, vector<48x16xf32>
    %c0_21 = arith.constant 0 : index
    %c0_22 = arith.constant 0 : index
    %31 = vector.load %arg8[%c0_21, %c0_22] : memref<16x128xf32, #tpu.memory_space<vmem>>, vector<16x128xf32>
    %cst_23 = arith.constant dense<0.000000e+00> : vector<48x128xf32>
    %32 = tpu.matmul %30, %31, %cst_23 {dimension_numbers = #tpu.dot_dimension_numbers<[1], [0], [0], [1], [0, 0, 1, 1], [], []>} : vector<48x16xf32>, vector<16x128xf32>, vector<48x128xf32> -> vector<48x128xf32>
    %c0_24 = arith.constant 0 : index
    %c0_25 = arith.constant 0 : index
    %33 = vector.load %arg9[%c0_24, %c0_25] : memref<1x128xf32, #tpu.memory_space<vmem>>, vector<1x128xf32>
    %34 = vector.broadcast %33 : vector<1x128xf32> to vector<48x128xf32>
    %35 = arith.addf %32, %34 : vector<48x128xf32>
    %c0_26 = arith.constant 0 : index
    %c0_27 = arith.constant 0 : index
    %36 = vector.load %arg10[%c0_26, %c0_27] : memref<1x128xf32, #tpu.memory_space<vmem>>, vector<1x128xf32>
    %cst_28 = arith.constant 0.000000e+00 : f32
    %37 = vector.broadcast %cst_28 : f32 to vector<1x128xf32>
    %38 = arith.subf %37, %36 : vector<1x128xf32>
    %39 = math.exp %38 : vector<1x128xf32>
    %40 = vector.broadcast %39 : vector<1x128xf32> to vector<48x128xf32>
    %41 = arith.mulf %35, %40 : vector<48x128xf32>
    %c0_29 = arith.constant 0 : index
    %c0_30 = arith.constant 0 : index
    %42 = vector.load %arg11[%c0_29, %c0_30] : memref<48x128xf32, #tpu.memory_space<vmem>>, vector<48x128xf32>
    tpu.vector_store %arg11[%c0_29, %c0_30], %41 {strides = array<i32>} : memref<48x128xf32, #tpu.memory_space<vmem>>, vector<48x128xf32>,
    %43 = arith.mulf %41, %41 : vector<48x128xf32>
    %cst_31 = arith.constant dense<0.000000e+00> : vector<48xf32>
    %44 = vector.multi_reduction <add>, %43, %cst_31 [1] : vector<48x128xf32> to vector<48xf32>
    %45 = vector.shape_cast %44 : vector<48xf32> to vector<48x1xf32>
    %c0_32 = arith.constant 0 : index
    %c0_33 = arith.constant 0 : index
    %46 = vector.load %arg12[%c0_32, %c0_33] : memref<48x1xf32, #tpu.memory_space<vmem>>, vector<48x1xf32>
    tpu.vector_store %arg12[%c0_32, %c0_33], %45 {strides = array<i32>} : memref<48x1xf32, #tpu.memory_space<vmem>>, vector<48x1xf32>,
    return
  }
  func.func @transform_0(%arg0: i32) -> (i32, i32) {
    %c0_i32 = arith.constant 0 : i32
    %c0_i32_0 = arith.constant 0 : i32
    return %arg0, %c0_i32 : i32, i32
  }
  func.func @transform_1(%arg0: i32) -> (i32, i32) {
    %c0_i32 = arith.constant 0 : i32
    %c0_i32_0 = arith.constant 0 : i32
    %c0_i32_1 = arith.constant 0 : i32
    return %c0_i32, %c0_i32_0 : i32, i32
  }
  func.func @transform_2(%arg0: i32) -> (i32, i32) {
    %c0_i32 = arith.constant 0 : i32
    %c0_i32_0 = arith.constant 0 : i32
    %c0_i32_1 = arith.constant 0 : i32
    return %c0_i32, %c0_i32_0 : i32, i32
  }
  func.func @transform_3(%arg0: i32) -> (i32, i32) {
    %c0_i32 = arith.constant 0 : i32
    %c0_i32_0 = arith.constant 0 : i32
    %c0_i32_1 = arith.constant 0 : i32
    return %c0_i32, %c0_i32_0 : i32, i32
  }
  func.func @transform_4(%arg0: i32) -> (i32, i32) {
    %c0_i32 = arith.constant 0 : i32
    %c0_i32_0 = arith.constant 0 : i32
    %c0_i32_1 = arith.constant 0 : i32
    return %c0_i32, %c0_i32_0 : i32, i32
  }
  func.func @transform_5(%arg0: i32) -> (i32, i32) {
    %c0_i32 = arith.constant 0 : i32
    %c0_i32_0 = arith.constant 0 : i32
    %c0_i32_1 = arith.constant 0 : i32
    return %c0_i32, %c0_i32_0 : i32, i32
  }
  func.func @transform_6(%arg0: i32) -> (i32, i32) {
    %c0_i32 = arith.constant 0 : i32
    %c0_i32_0 = arith.constant 0 : i32
    %c0_i32_1 = arith.constant 0 : i32
    return %c0_i32, %c0_i32_0 : i32, i32
  }
  func.func @transform_7(%arg0: i32) -> (i32, i32) {
    %c0_i32 = arith.constant 0 : i32
    %c0_i32_0 = arith.constant 0 : i32
    %c0_i32_1 = arith.constant 0 : i32
    return %c0_i32, %c0_i32_0 : i32, i32
  }
  func.func @transform_8(%arg0: i32) -> (i32, i32) {
    %c0_i32 = arith.constant 0 : i32
    %c0_i32_0 = arith.constant 0 : i32
    %c0_i32_1 = arith.constant 0 : i32
    return %c0_i32, %c0_i32_0 : i32, i32
  }
  func.func @transform_9(%arg0: i32) -> (i32, i32) {
    %c0_i32 = arith.constant 0 : i32
    %c0_i32_0 = arith.constant 0 : i32
    %c0_i32_1 = arith.constant 0 : i32
    return %c0_i32, %c0_i32_0 : i32, i32
  }
  func.func @transform_10(%arg0: i32) -> (i32, i32) {
    %c0_i32 = arith.constant 0 : i32
    %c0_i32_0 = arith.constant 0 : i32
    return %arg0, %c0_i32 : i32, i32
  }
  func.func @transform_11(%arg0: i32) -> (i32, i32) {
    %c0_i32 = arith.constant 0 : i32
    %c0_i32_0 = arith.constant 0 : i32
    return %arg0, %c0_i32 : i32, i32
  }
}

</mosaic_0001>

<llo_original>
// kernel: tpu_custom_call.1
$region0: #{tpu_custom_call.1}
  #allocation0 [shape = 'u32[]', space=smem, size = 0x4, offset = 0x4, fixed_abs, tag = 'smem constant byte address 0x4 - core index']
  #allocation1 [shape = 'u32[144,128]{1,0:T(1,128)}', space=vmem, size = 0x12000, scoped, tag = 'internal scratch']
  %s0 = inlined_call_operand.vmem [shape: f32[48,8], index: 0, kind: input, shape index: {}]
  %s1 = inlined_call_operand.vmem [shape: f32[8,16], index: 1, kind: input, shape index: {}]
  %s2 = inlined_call_operand.vmem [shape: f32[1,16], index: 2, kind: input, shape index: {}]
  %s3 = inlined_call_operand.vmem [shape: f32[16,16], index: 3, kind: input, shape index: {}]
  %s4 = inlined_call_operand.vmem [shape: f32[1,16], index: 4, kind: input, shape index: {}]
  %s5 = inlined_call_operand.vmem [shape: f32[16,16], index: 5, kind: input, shape index: {}]
  %s6 = inlined_call_operand.vmem [shape: f32[1,16], index: 6, kind: input, shape index: {}]
  %s7 = inlined_call_operand.vmem [shape: f32[16,128], index: 7, kind: input, shape index: {}]
  %s8 = inlined_call_operand.vmem [shape: f32[1,128], index: 8, kind: input, shape index: {}]
  %s9 = inlined_call_operand.vmem [shape: f32[1,128], index: 9, kind: input, shape index: {}]
  %s10 = inlined_call_operand.hbm [shape: f32[48,128], index: 10, kind: output, shape index: {0}]
  %s11 = inlined_call_operand.vmem [shape: f32[48,1], index: 11, kind: output, shape index: {1}]
  %12 = xla_tuple %s10, %s11
  %s13 = sld [smem:[#allocation0]]
  $region58: #{tpu_custom_call.1} parent=0
    _
  %s15 = ssub.s32 1, %s13
  %s16 = scalar_select 0, %s15, %s13
  $region1: #{tpu_custom_call.1} parent=0
    #allocation2 [shape = 'u8[24576]{0}', space=vmem, size = 0x6000, scoped, tag = 'output window, operand 0, single buffered']
    #allocation3 [shape = 's32[1]{0}', space=sflag, size = 0x4, scoped, tag = 'scoped memory for tpu_custom_call.1']
    %17 = vsyncpa [#allocation3], 0
    // Predicated region
    $region2: #{tpu_custom_call.1} parent=1 // pred_check
      _
    $region3: #{tpu_custom_call.1} parent=1 // pred_check_branch
      %19 = sbr.rel (0) target = $region5
    $region4: #{tpu_custom_call.1} parent=1 // pred_region
      _
    $region5: #{tpu_custom_call.1} parent=1 // pred_fallthru
      _
    // Predicated region
    $region6: #{tpu_custom_call.1} parent=1 // pred_check
      _
    $region7: #{tpu_custom_call.1} parent=1 // pred_check_branch
      %21 = sbr.rel (0) target = $region9
    $region8: #{tpu_custom_call.1} parent=1 // pred_region
      _
    $region9: #{tpu_custom_call.1} parent=1 // pred_fallthru
      _
    // Predicated region
    $region10: #{tpu_custom_call.1} parent=1 // pred_check
      _
    $region11: #{tpu_custom_call.1} parent=1 // pred_check_branch
      %23 = sbr.rel (0) target = $region13
    $region12: #{tpu_custom_call.1} parent=1 // pred_region
      _
    $region13: #{tpu_custom_call.1} parent=1 // pred_fallthru
      _
    // Predicated region
    $region14: #{tpu_custom_call.1} parent=1 // pred_check
      _
    $region15: #{tpu_custom_call.1} parent=1 // pred_check_branch
      %25 = sbr.rel (0) target = $region17
    $region16: #{tpu_custom_call.1} parent=1 // pred_region
      _
    $region17: #{tpu_custom_call.1} parent=1 // pred_fallthru
      _
    // Predicated region
    $region18: #{tpu_custom_call.1} parent=1 // pred_check
      _
    $region19: #{tpu_custom_call.1} parent=1 // pred_check_branch
      %27 = sbr.rel (0) target = $region21
    $region20: #{tpu_custom_call.1} parent=1 // pred_region
      _
    $region21: #{tpu_custom_call.1} parent=1 // pred_fallthru
      _
    // Predicated region
    $region22: #{tpu_custom_call.1} parent=1 // pred_check
      _
    $region23: #{tpu_custom_call.1} parent=1 // pred_check_branch
      %29 = sbr.rel (0) target = $region25
    $region24: #{tpu_custom_call.1} parent=1 // pred_region
      _
    $region25: #{tpu_custom_call.1} parent=1 // pred_fallthru
      _
    // Predicated region
    $region26: #{tpu_custom_call.1} parent=1 // pred_check
      _
    $region27: #{tpu_custom_call.1} parent=1 // pred_check_branch
      %31 = sbr.rel (0) target = $region29
    $region28: #{tpu_custom_call.1} parent=1 // pred_region
      _
    $region29: #{tpu_custom_call.1} parent=1 // pred_fallthru
      _
    // Predicated region
    $region30: #{tpu_custom_call.1} parent=1 // pred_check
      _
    $region31: #{tpu_custom_call.1} parent=1 // pred_check_branch
      %33 = sbr.rel (0) target = $region33
    $region32: #{tpu_custom_call.1} parent=1 // pred_region
      _
    $region33: #{tpu_custom_call.1} parent=1 // pred_fallthru
      _
    // Predicated region
    $region34: #{tpu_custom_call.1} parent=1 // pred_check
      _
    $region35: #{tpu_custom_call.1} parent=1 // pred_check_branch
      %35 = sbr.rel (0) target = $region37
    $region36: #{tpu_custom_call.1} parent=1 // pred_region
      _
    $region37: #{tpu_custom_call.1} parent=1 // pred_fallthru
      _
    // Predicated region
    $region38: #{tpu_custom_call.1} parent=1 // pred_check
      _
    $region39: #{tpu_custom_call.1} parent=1 // pred_check_branch
      %37 = sbr.rel (0) target = $region41
    $region40: #{tpu_custom_call.1} parent=1 // pred_region
      _
    $region41: #{tpu_custom_call.1} parent=1 // pred_fallthru
      _
    %v38 = vld [vmem:[%s0] sm:$0xff]
    %v39 = vld [vmem:[%s0 + $0x8] sm:$0xff]
    %v40 = vld [vmem:[%s0 + $0x10] sm:$0xff]
    %v41 = vld [vmem:[%s0 + $0x18] sm:$0xff]
    %v42 = vld [vmem:[%s0 + $0x20] sm:$0xff]
    %v43 = vld [vmem:[%s0 + $0x28] sm:$0xff]
    %v44 = vld [vmem:[%s1] sm:$0xff]
    %v45 = vld [vmem:[%s2] sm:$0x1]
    %v47 = vlaneseq
    %v48 = vshrl.u32 %v47, 7
    %v49 = vsub.s32 0, %v48
    %v50 = vrot.slane %v45, %v49
    %vm52 = vcmask 64512
    %v54 = vsel %vm52, %v38, 0
    %v57 = vsel %vm52, %v39, 0
    %v60 = vsel %vm52, %v40, 0
    %v63 = vsel %vm52, %v41, 0
    %v66 = vsel %vm52, %v42, 0
    %v69 = vsel %vm52, %v43, 0
    %71 = vmatprep.subr.mxu0 0.0
    %72 = vmatpush1.msra.mxu0 %v44
    %73 = vmatprep.subr.mxu0 0.0
    %74 = vmatpush1.msra.mxu0 0.0
    %75 = vmatprep.subr.mxu0 0.0
    %76 = vmatpush1.msra.mxu0 0.0
    %77 = vmatprep.subr.mxu0 0.0
    %78 = vmatpush1.msra.mxu0 0.0
    %79 = vmatprep.subr.mxu0 0.0
    %80 = vmatpush1.msra.mxu0 0.0
    %81 = vmatprep.subr.mxu0 0.0
    %82 = vmatpush1.msra.mxu0 0.0
    %83 = vmatprep.subr.mxu0 0.0
    %84 = vmatpush1.msra.mxu0 0.0
    %85 = vmatprep.subr.mxu0 0.0
    %86 = vmatpush1.msra.mxu0 0.0
    %87 = vmatprep.subr.mxu0 0.0
    %88 = vmatpush1.msra.mxu0 0.0
    %89 = vmatprep.subr.mxu0 0.0
    %90 = vmatpush1.msra.mxu0 0.0
    %91 = vmatprep.subr.mxu0 0.0
    %92 = vmatpush1.msra.mxu0 0.0
    %93 = vmatprep.subr.mxu0 0.0
    %94 = vmatpush1.msra.mxu0 0.0
    %95 = vmatprep.subr.mxu0 0.0
    %96 = vmatpush1.msra.mxu0 0.0
    %97 = vmatprep.subr.mxu0 0.0
    %98 = vmatpush1.msra.mxu0 0.0
    %99 = vmatprep.subr.mxu0 0.0
    %100 = vmatpush1.msra.mxu0 0.0
    %101 = vmatprep.subr.mxu0 0.0
    %102 = vmatpush1.msra.mxu0 0.0
    %103 = vmatprep.subr.mxu0 0.0
    %104 = vmatpush1.msra.mxu0 0.0
    %105 = vmatprep.subr.mxu0 0.0
    %106 = vmatpush1.msra.mxu0 0.0
    %107 = vmatprep.subr.mxu0 0.0
    %108 = vmatpush1.msra.mxu0 0.0
    %109 = vmatprep.subr.mxu0 0.0
    %110 = vmatpush1.msra.mxu0 0.0
    %111 = vmatprep.subr.mxu0 0.0
    %112 = vmatpush1.msra.mxu0 0.0
    %113 = vmatprep.subr.mxu0 0.0
    %114 = vmatpush1.msra.mxu0 0.0
    %115 = vmatprep.subr.mxu0 0.0
    %116 = vmatpush1.msra.mxu0 0.0
    %117 = vmatprep.subr.mxu0 0.0
    %118 = vmatpush1.msra.mxu0 0.0
    %119 = vmatprep.subr.mxu0 0.0
    %120 = vmatpush1.msra.mxu0 0.0
    %121 = vmatprep.subr.mxu0 0.0
    %122 = vmatpush1.msra.mxu0 0.0
    %123 = vmatprep.subr.mxu0 0.0
    %124 = vmatpush1.msra.mxu0 0.0
    %125 = vmatprep.subr.mxu0 0.0
    %126 = vmatpush1.msra.mxu0 0.0
    %127 = vmatprep.subr.mxu0 0.0
    %128 = vmatpush1.msra.mxu0 0.0
    %129 = vmatprep.subr.mxu0 0.0
    %130 = vmatpush1.msra.mxu0 0.0
    %131 = vmatprep.subr.mxu0 0.0
    %132 = vmatpush1.msra.mxu0 0.0
    %133 = vmatprep.subr.mxu0 0.0
    %134 = vmatpush1.msra.mxu0 0.0
    %135 = vmatprep.mubr.f32.mxu0 0.0
    %136 = vmatmul.mubr.f32.gmra.mrb[0].mxu0 %v54
    %v137 = vpop.f32.mrb[0].mxu0
    %v138 = vadd.f32 %v50, %v137
    %v139 = vpop.f32.mrb[0].mxu0
    %140 = vmatprep.mubr.f32.mxu0 0.0
    %141 = vmatmul.mubr.f32.gmra.mrb[0].mxu0 %v57
    %v142 = vpop.f32.mrb[0].mxu0
    %v143 = vadd.f32 %v50, %v142
    %v144 = vpop.f32.mrb[0].mxu0
    %145 = vmatprep.mubr.f32.mxu0 0.0
    %146 = vmatmul.mubr.f32.gmra.mrb[0].mxu0 %v60
    %v147 = vpop.f32.mrb[0].mxu0
    %v148 = vadd.f32 %v50, %v147
    %v149 = vpop.f32.mrb[0].mxu0
    %150 = vmatprep.mubr.f32.mxu0 0.0
    %151 = vmatmul.mubr.f32.gmra.mrb[0].mxu0 %v63
    %v152 = vpop.f32.mrb[0].mxu0
    %v153 = vadd.f32 %v50, %v152
    %v154 = vpop.f32.mrb[0].mxu0
    %155 = vmatprep.mubr.f32.mxu0 0.0
    %156 = vmatmul.mubr.f32.gmra.mrb[0].mxu0 %v66
    %v157 = vpop.f32.mrb[0].mxu0
    %v158 = vadd.f32 %v50, %v157
    %v159 = vpop.f32.mrb[0].mxu0
    %160 = vmatprep.mubr.f32.mxu0 0.0
    %161 = vmatmul.mubr.f32.gmra.mrb[0].mxu0 %v69
    %v162 = vpop.f32.mrb[0].mxu0
    %v163 = vadd.f32 %v50, %v162
    %v164 = vpop.f32.mrb[0].mxu0
    %165 = vdwg.mxu0
    %vm166 = vcmp.gt.f32.partialorder %v138, 0.0
    %vm167 = vcmp.gt.f32.partialorder %v143, 0.0
    %vm168 = vcmp.gt.f32.partialorder %v148, 0.0
    %vm169 = vcmp.gt.f32.partialorder %v153, 0.0
    %vm170 = vcmp.gt.f32.partialorder %v158, 0.0
    %vm171 = vcmp.gt.f32.partialorder %v163, 0.0
    %v172 = vmul.f32 %v138, 0.01
    %v173 = vmul.f32 %v143, 0.01
    %v174 = vmul.f32 %v148, 0.01
    %v175 = vmul.f32 %v153, 0.01
    %v176 = vmul.f32 %v158, 0.01
    %v177 = vmul.f32 %v163, 0.01
    %v178 = vsel %vm166, %v138, %v172
    %v179 = vsel %vm167, %v143, %v173
    %v180 = vsel %vm168, %v148, %v174
    %v181 = vsel %vm169, %v153, %v175
    %v182 = vsel %vm170, %v158, %v176
    %v183 = vsel %vm171, %v163, %v177
    %v184 = vld [vmem:[%s3] sm:$0xff]
    %v185 = vld [vmem:[%s3 + $0x8] sm:$0xff]
    %v186 = vld [vmem:[%s4] sm:$0x1]
    %v188 = vlaneseq
    %v189 = vshrl.u32 %v188, 7
    %v190 = vsub.s32 0, %v189
    %v191 = vrot.slane %v186, %v190
    %vm193 = vcmask 130048
    %v195 = vsel %vm193, %v178, 0
    %v198 = vsel %vm193, %v179, 0
    %v201 = vsel %vm193, %v180, 0
    %v204 = vsel %vm193, %v181, 0
    %v207 = vsel %vm193, %v182, 0
    %v210 = vsel %vm193, %v183, 0
    %212 = vmatprep.subr.mxu0 0.0
    %213 = vmatpush1.msra.mxu0 %v184
    %214 = vmatprep.subr.mxu0 0.0
    %215 = vmatpush1.msra.mxu0 %v185
    %216 = vmatprep.subr.mxu0 0.0
    %217 = vmatpush1.msra.mxu0 0.0
    %218 = vmatprep.subr.mxu0 0.0
    %219 = vmatpush1.msra.mxu0 0.0
    %220 = vmatprep.subr.mxu0 0.0
    %221 = vmatpush1.msra.mxu0 0.0
    %222 = vmatprep.subr.mxu0 0.0
    %223 = vmatpush1.msra.mxu0 0.0
    %224 = vmatprep.subr.mxu0 0.0
    %225 = vmatpush1.msra.mxu0 0.0
    %226 = vmatprep.subr.mxu0 0.0
    %227 = vmatpush1.msra.mxu0 0.0
    %228 = vmatprep.subr.mxu0 0.0
    %229 = vmatpush1.msra.mxu0 0.0
    %230 = vmatprep.subr.mxu0 0.0
    %231 = vmatpush1.msra.mxu0 0.0
    %232 = vmatprep.subr.mxu0 0.0
    %233 = vmatpush1.msra.mxu0 0.0
    %234 = vmatprep.subr.mxu0 0.0
    %235 = vmatpush1.msra.mxu0 0.0
    %236 = vmatprep.subr.mxu0 0.0
    %237 = vmatpush1.msra.mxu0 0.0
    %238 = vmatprep.subr.mxu0 0.0
    %239 = vmatpush1.msra.mxu0 0.0
    %240 = vmatprep.subr.mxu0 0.0
    %241 = vmatpush1.msra.mxu0 0.0
    %242 = vmatprep.subr.mxu0 0.0
    %243 = vmatpush1.msra.mxu0 0.0
    %244 = vmatprep.subr.mxu0 0.0
    %245 = vmatpush1.msra.mxu0 0.0
    %246 = vmatprep.subr.mxu0 0.0
    %247 = vmatpush1.msra.mxu0 0.0
    %248 = vmatprep.subr.mxu0 0.0
    %249 = vmatpush1.msra.mxu0 0.0
    %250 = vmatprep.subr.mxu0 0.0
    %251 = vmatpush1.msra.mxu0 0.0
    %252 = vmatprep.subr.mxu0 0.0
    %253 = vmatpush1.msra.mxu0 0.0
    %254 = vmatprep.subr.mxu0 0.0
    %255 = vmatpush1.msra.mxu0 0.0
    %256 = vmatprep.subr.mxu0 0.0
    %257 = vmatpush1.msra.mxu0 0.0
    %258 = vmatprep.subr.mxu0 0.0
    %259 = vmatpush1.msra.mxu0 0.0
    %260 = vmatprep.subr.mxu0 0.0
    %261 = vmatpush1.msra.mxu0 0.0
    %262 = vmatprep.subr.mxu0 0.0
    %263 = vmatpush1.msra.mxu0 0.0
    %264 = vmatprep.subr.mxu0 0.0
    %265 = vmatpush1.msra.mxu0 0.0
    %266 = vmatprep.subr.mxu0 0.0
    %267 = vmatpush1.msra.mxu0 0.0
    %268 = vmatprep.subr.mxu0 0.0
    %269 = vmatpush1.msra.mxu0 0.0
    %270 = vmatprep.subr.mxu0 0.0
    %271 = vmatpush1.msra.mxu0 0.0
    %272 = vmatprep.subr.mxu0 0.0
    %273 = vmatpush1.msra.mxu0 0.0
    %274 = vmatprep.subr.mxu0 0.0
    %275 = vmatpush1.msra.mxu0 0.0
    %276 = vmatprep.mubr.f32.mxu0 0.0
    %277 = vmatmul.mubr.f32.gmra.mrb[0].mxu0 %v195
    %v278 = vpop.f32.mrb[0].mxu0
    %v279 = vadd.f32 %v191, %v278
    %v280 = vpop.f32.mrb[0].mxu0
    %281 = vmatprep.mubr.f32.mxu0 0.0
    %282 = vmatmul.mubr.f32.gmra.mrb[0].mxu0 %v198
    %v283 = vpop.f32.mrb[0].mxu0
    %v284 = vadd.f32 %v191, %v283
    %v285 = vpop.f32.mrb[0].mxu0
    %286 = vmatprep.mubr.f32.mxu0 0.0
    %287 = vmatmul.mubr.f32.gmra.mrb[0].mxu0 %v201
    %v288 = vpop.f32.mrb[0].mxu0
    %v289 = vadd.f32 %v191, %v288
    %v290 = vpop.f32.mrb[0].mxu0
    %291 = vmatprep.mubr.f32.mxu0 0.0
    %292 = vmatmul.mubr.f32.gmra.mrb[0].mxu0 %v204
    %v293 = vpop.f32.mrb[0].mxu0
    %v294 = vadd.f32 %v191, %v293
    %v295 = vpop.f32.mrb[0].mxu0
    %296 = vmatprep.mubr.f32.mxu0 0.0
    %297 = vmatmul.mubr.f32.gmra.mrb[0].mxu0 %v207
    %v298 = vpop.f32.mrb[0].mxu0
    %v299 = vadd.f32 %v191, %v298
    %v300 = vpop.f32.mrb[0].mxu0
    %301 = vmatprep.mubr.f32.mxu0 0.0
    %302 = vmatmul.mubr.f32.gmra.mrb[0].mxu0 %v210
    %v303 = vpop.f32.mrb[0].mxu0
    %v304 = vadd.f32 %v191, %v303
    %v305 = vpop.f32.mrb[0].mxu0
    %306 = vdwg.mxu0
    %vm307 = vcmp.gt.f32.partialorder %v279, 0.0
    %vm308 = vcmp.gt.f32.partialorder %v284, 0.0
    %vm309 = vcmp.gt.f32.partialorder %v289, 0.0
    %vm310 = vcmp.gt.f32.partialorder %v294, 0.0
    %vm311 = vcmp.gt.f32.partialorder %v299, 0.0
    %vm312 = vcmp.gt.f32.partialorder %v304, 0.0
    %v313 = vmul.f32 %v279, 0.01
    %v314 = vmul.f32 %v284, 0.01
    %v315 = vmul.f32 %v289, 0.01
    %v316 = vmul.f32 %v294, 0.01
    %v317 = vmul.f32 %v299, 0.01
    %v318 = vmul.f32 %v304, 0.01
    %v319 = vsel %vm307, %v279, %v313
    %v320 = vsel %vm308, %v284, %v314
    %v321 = vsel %vm309, %v289, %v315
    %v322 = vsel %vm310, %v294, %v316
    %v323 = vsel %vm311, %v299, %v317
    %v324 = vsel %vm312, %v304, %v318
    %v325 = vld [vmem:[%s5] sm:$0xff]
    %v326 = vld [vmem:[%s5 + $0x8] sm:$0xff]
    %v327 = vld [vmem:[%s6] sm:$0x1]
    %v329 = vlaneseq
    %v330 = vshrl.u32 %v329, 7
    %v331 = vsub.s32 0, %v330
    %v332 = vrot.slane %v327, %v331
    %v335 = vsel %vm193, %v319, 0
    %v338 = vsel %vm193, %v320, 0
    %v341 = vsel %vm193, %v321, 0
    %v344 = vsel %vm193, %v322, 0
    %v347 = vsel %vm193, %v323, 0
    %v350 = vsel %vm193, %v324, 0
    %352 = vmatprep.subr.mxu0 0.0
    %353 = vmatpush1.msra.mxu0 %v325
    %354 = vmatprep.subr.mxu0 0.0
    %355 = vmatpush1.msra.mxu0 %v326
    %356 = vmatprep.subr.mxu0 0.0
    %357 = vmatpush1.msra.mxu0 0.0
    %358 = vmatprep.subr.mxu0 0.0
    %359 = vmatpush1.msra.mxu0 0.0
    %360 = vmatprep.subr.mxu0 0.0
    %361 = vmatpush1.msra.mxu0 0.0
    %362 = vmatprep.subr.mxu0 0.0
    %363 = vmatpush1.msra.mxu0 0.0
    %364 = vmatprep.subr.mxu0 0.0
    %365 = vmatpush1.msra.mxu0 0.0
    %366 = vmatprep.subr.mxu0 0.0
    %367 = vmatpush1.msra.mxu0 0.0
    %368 = vmatprep.subr.mxu0 0.0
    %369 = vmatpush1.msra.mxu0 0.0
    %370 = vmatprep.subr.mxu0 0.0
    %371 = vmatpush1.msra.mxu0 0.0
    %372 = vmatprep.subr.mxu0 0.0
    %373 = vmatpush1.msra.mxu0 0.0
    %374 = vmatprep.subr.mxu0 0.0
    %375 = vmatpush1.msra.mxu0 0.0
    %376 = vmatprep.subr.mxu0 0.0
    %377 = vmatpush1.msra.mxu0 0.0
    %378 = vmatprep.subr.mxu0 0.0
    %379 = vmatpush1.msra.mxu0 0.0
    %380 = vmatprep.subr.mxu0 0.0
    %381 = vmatpush1.msra.mxu0 0.0
    %382 = vmatprep.subr.mxu0 0.0
    %383 = vmatpush1.msra.mxu0 0.0
    %384 = vmatprep.subr.mxu0 0.0
    %385 = vmatpush1.msra.mxu0 0.0
    %386 = vmatprep.subr.mxu0 0.0
    %387 = vmatpush1.msra.mxu0 0.0
    %388 = vmatprep.subr.mxu0 0.0
    %389 = vmatpush1.msra.mxu0 0.0
    %390 = vmatprep.subr.mxu0 0.0
    %391 = vmatpush1.msra.mxu0 0.0
    %392 = vmatprep.subr.mxu0 0.0
    %393 = vmatpush1.msra.mxu0 0.0
    %394 = vmatprep.subr.mxu0 0.0
    %395 = vmatpush1.msra.mxu0 0.0
    %396 = vmatprep.subr.mxu0 0.0
    %397 = vmatpush1.msra.mxu0 0.0
    %398 = vmatprep.subr.mxu0 0.0
    %399 = vmatpush1.msra.mxu0 0.0
    %400 = vmatprep.subr.mxu0 0.0
    %401 = vmatpush1.msra.mxu0 0.0
    %402 = vmatprep.subr.mxu0 0.0
    %403 = vmatpush1.msra.mxu0 0.0
    %404 = vmatprep.subr.mxu0 0.0
    %405 = vmatpush1.msra.mxu0 0.0
    %406 = vmatprep.subr.mxu0 0.0
    %407 = vmatpush1.msra.mxu0 0.0
    %408 = vmatprep.subr.mxu0 0.0
    %409 = vmatpush1.msra.mxu0 0.0
    %410 = vmatprep.subr.mxu0 0.0
    %411 = vmatpush1.msra.mxu0 0.0
    %412 = vmatprep.subr.mxu0 0.0
    %413 = vmatpush1.msra.mxu0 0.0
    %414 = vmatprep.subr.mxu0 0.0
    %415 = vmatpush1.msra.mxu0 0.0
    %416 = vmatprep.mubr.f32.mxu0 0.0
    %417 = vmatmul.mubr.f32.gmra.mrb[0].mxu0 %v335
    %v418 = vpop.f32.mrb[0].mxu0
    %v419 = vadd.f32 %v332, %v418
    %v420 = vpop.f32.mrb[0].mxu0
    %421 = vmatprep.mubr.f32.mxu0 0.0
    %422 = vmatmul.mubr.f32.gmra.mrb[0].mxu0 %v338
    %v423 = vpop.f32.mrb[0].mxu0
    %v424 = vadd.f32 %v332, %v423
    %v425 = vpop.f32.mrb[0].mxu0
    %426 = vmatprep.mubr.f32.mxu0 0.0
    %427 = vmatmul.mubr.f32.gmra.mrb[0].mxu0 %v341
    %v428 = vpop.f32.mrb[0].mxu0
    %v429 = vadd.f32 %v332, %v428
    %v430 = vpop.f32.mrb[0].mxu0
    %431 = vmatprep.mubr.f32.mxu0 0.0
    %432 = vmatmul.mubr.f32.gmra.mrb[0].mxu0 %v344
    %v433 = vpop.f32.mrb[0].mxu0
    %v434 = vadd.f32 %v332, %v433
    %v435 = vpop.f32.mrb[0].mxu0
    %436 = vmatprep.mubr.f32.mxu0 0.0
    %437 = vmatmul.mubr.f32.gmra.mrb[0].mxu0 %v347
    %v438 = vpop.f32.mrb[0].mxu0
    %v439 = vadd.f32 %v332, %v438
    %v440 = vpop.f32.mrb[0].mxu0
    %441 = vmatprep.mubr.f32.mxu0 0.0
    %442 = vmatmul.mubr.f32.gmra.mrb[0].mxu0 %v350
    %v443 = vpop.f32.mrb[0].mxu0
    %v444 = vadd.f32 %v332, %v443
    %v445 = vpop.f32.mrb[0].mxu0
    %446 = vdwg.mxu0
    %vm447 = vcmp.gt.f32.partialorder %v419, 0.0
    %vm448 = vcmp.gt.f32.partialorder %v424, 0.0
    %vm449 = vcmp.gt.f32.partialorder %v429, 0.0
    %vm450 = vcmp.gt.f32.partialorder %v434, 0.0
    %vm451 = vcmp.gt.f32.partialorder %v439, 0.0
    %vm452 = vcmp.gt.f32.partialorder %v444, 0.0
    %v453 = vmul.f32 %v419, 0.01
    %v454 = vmul.f32 %v424, 0.01
    %v455 = vmul.f32 %v429, 0.01
    %v456 = vmul.f32 %v434, 0.01
    %v457 = vmul.f32 %v439, 0.01
    %v458 = vmul.f32 %v444, 0.01
    %v459 = vsel %vm447, %v419, %v453
    %v460 = vsel %vm448, %v424, %v454
    %v461 = vsel %vm449, %v429, %v455
    %v462 = vsel %vm450, %v434, %v456
    %v463 = vsel %vm451, %v439, %v457
    %v464 = vsel %vm452, %v444, %v458
    %v465 = vld [vmem:[%s7] sm:$0xff]
    %v466 = vld [vmem:[%s7 + $0x8] sm:$0xff]
    %v467 = vld [vmem:[%s8] sm:$0x1]
    %v469 = vlaneseq
    %v470 = vshrl.u32 %v469, 7
    %v471 = vsub.s32 0, %v470
    %v472 = vrot.slane %v467, %v471
    %v475 = vsel %vm193, %v459, 0
    %v478 = vsel %vm193, %v460, 0
    %v481 = vsel %vm193, %v461, 0
    %v484 = vsel %vm193, %v462, 0
    %v487 = vsel %vm193, %v463, 0
    %v490 = vsel %vm193, %v464, 0
    %492 = vmatprep.subr.mxu0 0.0
    %493 = vmatpush1.msra.mxu0 %v465
    %494 = vmatprep.subr.mxu0 0.0
    %495 = vmatpush1.msra.mxu0 %v466
    %496 = vmatprep.subr.mxu0 0.0
    %497 = vmatpush1.msra.mxu0 0.0
    %498 = vmatprep.subr.mxu0 0.0
    %499 = vmatpush1.msra.mxu0 0.0
    %500 = vmatprep.subr.mxu0 0.0
    %501 = vmatpush1.msra.mxu0 0.0
    %502 = vmatprep.subr.mxu0 0.0
    %503 = vmatpush1.msra.mxu0 0.0
    %504 = vmatprep.subr.mxu0 0.0
    %505 = vmatpush1.msra.mxu0 0.0
    %506 = vmatprep.subr.mxu0 0.0
    %507 = vmatpush1.msra.mxu0 0.0
    %508 = vmatprep.subr.mxu0 0.0
    %509 = vmatpush1.msra.mxu0 0.0
    %510 = vmatprep.subr.mxu0 0.0
    %511 = vmatpush1.msra.mxu0 0.0
    %512 = vmatprep.subr.mxu0 0.0
    %513 = vmatpush1.msra.mxu0 0.0
    %514 = vmatprep.subr.mxu0 0.0
    %515 = vmatpush1.msra.mxu0 0.0
    %516 = vmatprep.subr.mxu0 0.0
    %517 = vmatpush1.msra.mxu0 0.0
    %518 = vmatprep.subr.mxu0 0.0
    %519 = vmatpush1.msra.mxu0 0.0
    %520 = vmatprep.subr.mxu0 0.0
    %521 = vmatpush1.msra.mxu0 0.0
    %522 = vmatprep.subr.mxu0 0.0
    %523 = vmatpush1.msra.mxu0 0.0
    %524 = vmatprep.subr.mxu0 0.0
    %525 = vmatpush1.msra.mxu0 0.0
    %526 = vmatprep.subr.mxu0 0.0
    %527 = vmatpush1.msra.mxu0 0.0
    %528 = vmatprep.subr.mxu0 0.0
    %529 = vmatpush1.msra.mxu0 0.0
    %530 = vmatprep.subr.mxu0 0.0
    %531 = vmatpush1.msra.mxu0 0.0
    %532 = vmatprep.subr.mxu0 0.0
    %533 = vmatpush1.msra.mxu0 0.0
    %534 = vmatprep.subr.mxu0 0.0
    %535 = vmatpush1.msra.mxu0 0.0
    %536 = vmatprep.subr.mxu0 0.0
    %537 = vmatpush1.msra.mxu0 0.0
    %538 = vmatprep.subr.mxu0 0.0
    %539 = vmatpush1.msra.mxu0 0.0
    %540 = vmatprep.subr.mxu0 0.0
    %541 = vmatpush1.msra.mxu0 0.0
    %542 = vmatprep.subr.mxu0 0.0
    %543 = vmatpush1.msra.mxu0 0.0
    %544 = vmatprep.subr.mxu0 0.0
    %545 = vmatpush1.msra.mxu0 0.0
    %546 = vmatprep.subr.mxu0 0.0
    %547 = vmatpush1.msra.mxu0 0.0
    %548 = vmatprep.subr.mxu0 0.0
    %549 = vmatpush1.msra.mxu0 0.0
    %550 = vmatprep.subr.mxu0 0.0
    %551 = vmatpush1.msra.mxu0 0.0
    %552 = vmatprep.subr.mxu0 0.0
    %553 = vmatpush1.msra.mxu0 0.0
    %554 = vmatprep.subr.mxu0 0.0
    %555 = vmatpush1.msra.mxu0 0.0
    %556 = vmatprep.mubr.f32.mxu0 0.0
    %557 = vmatmul.mubr.f32.gmra.mrb[0].mxu0 %v475
    %v558 = vpop.f32.mrb[0].mxu0
    %v559 = vadd.f32 %v472, %v558
    %v560 = vpop.f32.mrb[0].mxu0
    %561 = vmatprep.mubr.f32.mxu0 0.0
    %562 = vmatmul.mubr.f32.gmra.mrb[0].mxu0 %v478
    %v563 = vpop.f32.mrb[0].mxu0
    %v564 = vadd.f32 %v472, %v563
    %v565 = vpop.f32.mrb[0].mxu0
    %566 = vmatprep.mubr.f32.mxu0 0.0
    %567 = vmatmul.mubr.f32.gmra.mrb[0].mxu0 %v481
    %v568 = vpop.f32.mrb[0].mxu0
    %v569 = vadd.f32 %v472, %v568
    %v570 = vpop.f32.mrb[0].mxu0
    %571 = vmatprep.mubr.f32.mxu0 0.0
    %572 = vmatmul.mubr.f32.gmra.mrb[0].mxu0 %v484
    %v573 = vpop.f32.mrb[0].mxu0
    %v574 = vadd.f32 %v472, %v573
    %v575 = vpop.f32.mrb[0].mxu0
    %576 = vmatprep.mubr.f32.mxu0 0.0
    %577 = vmatmul.mubr.f32.gmra.mrb[0].mxu0 %v487
    %v578 = vpop.f32.mrb[0].mxu0
    %v579 = vadd.f32 %v472, %v578
    %v580 = vpop.f32.mrb[0].mxu0
    %581 = vmatprep.mubr.f32.mxu0 0.0
    %582 = vmatmul.mubr.f32.gmra.mrb[0].mxu0 %v490
    %v583 = vpop.f32.mrb[0].mxu0
    %v584 = vadd.f32 %v472, %v583
    %v585 = vpop.f32.mrb[0].mxu0
    %586 = vdwg.mxu0
    %v587 = vld [vmem:[%s9] sm:$0x1]
    %v588 = vsub.f32 0.0, %v587
    %v589 = vmul.f32 %v588, 1.442695
    %v590 = vpow.pop %v589
    %v592 = vlaneseq
    %v593 = vshrl.u32 %v592, 7
    %v594 = vsub.s32 0, %v593
    %v595 = vrot.slane %v590, %v594
    %v597 = vmul.f32 %v559, %v595
    %v598 = vmul.f32 %v564, %v595
    %v599 = vmul.f32 %v569, %v595
    %v600 = vmul.f32 %v574, %v595
    %v601 = vmul.f32 %v579, %v595
    %v602 = vmul.f32 %v584, %v595
    %603 = vst [vmem:[#allocation2] sm:$0xff] %v597
    %604 = vst [vmem:[#allocation2 + $0x8] sm:$0xff] %v598
    %605 = vst [vmem:[#allocation2 + $0x10] sm:$0xff] %v599
    %606 = vst [vmem:[#allocation2 + $0x18] sm:$0xff] %v600
    %607 = vst [vmem:[#allocation2 + $0x20] sm:$0xff] %v601
    %608 = vst [vmem:[#allocation2 + $0x28] sm:$0xff] %v602
    %v609 = vmul.f32 %v597, %v597
    %v610 = vmul.f32 %v598, %v598
    %v611 = vmul.f32 %v599, %v599
    %v612 = vmul.f32 %v600, %v600
    %v613 = vmul.f32 %v601, %v601
    %v614 = vmul.f32 %v602, %v602
    %615 = vadd.xlane.f32.xlu0 %v609
    %v616 = vpop.xlane.xlu0 %615
    %617 = vadd.xlane.f32.xlu0 %v610
    %v618 = vpop.xlane.xlu0 %617
    %619 = vadd.xlane.f32.xlu0 %v611
    %v620 = vpop.xlane.xlu0 %619
    %621 = vadd.xlane.f32.xlu0 %v612
    %v622 = vpop.xlane.xlu0 %621
    %623 = vadd.xlane.f32.xlu0 %v613
    %v624 = vpop.xlane.xlu0 %623
    %625 = vadd.xlane.f32.xlu0 %v614
    %v626 = vpop.xlane.xlu0 %625
    %vm627 = vcmask 7168
    %628 = vst.msk [vmem:[%s11] sm:$0xff] %vm627, %v616
    %629 = vst.msk [vmem:[%s11 + $0x8] sm:$0xff] %vm627, %v618
    %630 = vst.msk [vmem:[%s11 + $0x10] sm:$0xff] %vm627, %v620
    %631 = vst.msk [vmem:[%s11 + $0x18] sm:$0xff] %vm627, %v622
    %632 = vst.msk [vmem:[%s11 + $0x20] sm:$0xff] %vm627, %v624
    %633 = vst.msk [vmem:[%s11 + $0x28] sm:$0xff] %vm627, %v626
    // Predicated region
    $region42: #{tpu_custom_call.1} parent=1 // pred_check
      _
    $region43: #{tpu_custom_call.1} parent=1 // pred_check_branch
      %635 = sbr.rel (0) target = $region45
    $region44: #{tpu_custom_call.1} parent=1 // pred_region
      %s637 = ssub.s32 768, 768
      %638 = vsyncadd [#allocation3], %s637
      %s639 = sshll.u32 [#allocation2], 4
      %s640 = int_to_ptr.vmem [resolvable:$true] %s639
      %645 = dma.vmem_to_hbm [thread:$0]  %s640, 768, %s10, [#allocation3], 128, 128, 8
    $region45: #{tpu_custom_call.1} parent=1 // pred_fallthru
      _
    // Predicated region
    $region46: #{tpu_custom_call.1} parent=1 // pred_check
      _
    $region47: #{tpu_custom_call.1} parent=1 // pred_check_branch
      %647 = sbr.rel (0) target = $region49
    $region48: #{tpu_custom_call.1} parent=1 // pred_region
      _
    $region49: #{tpu_custom_call.1} parent=1 // pred_fallthru
      _
    // Predicated region
    $region50: #{tpu_custom_call.1} parent=1 // pred_check
      _
    $region51: #{tpu_custom_call.1} parent=1 // pred_check_branch
      %649 = sbr.rel (0) target = $region53
    $region52: #{tpu_custom_call.1} parent=1 // pred_region
      %650 = dma.done [#allocation3], 768
    $region53: #{tpu_custom_call.1} parent=1 // pred_fallthru
      _
    // Predicated region
    $region54: #{tpu_custom_call.1} parent=1 // pred_check
      _
    $region55: #{tpu_custom_call.1} parent=1 // pred_check_branch
      %652 = sbr.rel (0) target = $region57
    $region56: #{tpu_custom_call.1} parent=1 // pred_region
      _
    $region57: #{tpu_custom_call.1} parent=1 // pred_fallthru
      _
    %653 = vsyncpa [#allocation3], 1

</llo_original>
